<compile_context>
chip_gen: v6e
topology: v6e:2x2x1
jax: 0.10.0
libtpu: 0.0.40
codegen_flags: <defaults>
</compile_context>

<pallas_src>
import functools

import jax
import jax.numpy as jnp
from jax.experimental import pallas as pl
from jax.experimental.pallas import tpu as pltpu


def _round_up(x, m):
    return (x + m - 1) // m * m


def _largest_divisor_tile(n, max_tile, mult):
    """Largest t <= max_tile with t % mult == 0 and n % t == 0, else None."""
    t = (min(max_tile, n) // mult) * mult
    while t >= mult:
        if n % t == 0:
            return t
        t -= mult
    return None


# ---------------------------------------------------------------------------
# Fused matmul + bias (+ReLU) kernels:  out = act(x @ w + b)
# ---------------------------------------------------------------------------
def _mm_kernel_single_k(x_ref, w_ref, b_ref, o_ref, *, relu):
    # One K block: no scratch accumulator, no pl.when phases.
    r = jnp.dot(x_ref[...], w_ref[...], preferred_element_type=jnp.float32)
    r = r + b_ref[...]
    if relu:
        r = jnp.maximum(r, 0.0)
    o_ref[...] = r.astype(o_ref.dtype)


def _mm_kernel_multi_k(x_ref, w_ref, b_ref, o_ref, acc_ref, *, relu):
    @pl.when(pl.program_id(2) == 0)
    def _():
        acc_ref[...] = jnp.zeros_like(acc_ref)

    acc_ref[...] += jnp.dot(
        x_ref[...], w_ref[...], preferred_element_type=jnp.float32
    )

    @pl.when(pl.program_id(2) == pl.num_programs(2) - 1)
    def _():
        r = acc_ref[...] + b_ref[...]
        if relu:
            r = jnp.maximum(r, 0.0)
        o_ref[...] = r.astype(o_ref.dtype)


_LHS_BLOCK_BYTES = 4 * 1024 * 1024        # bf16 LHS tile budget (single buffer)
_RHS_BLOCK_BYTES = 3 * 1024 * 1024 + 512 * 1024  # ~3.5 MB weight tile budget
_FULL_K_VMEM_BYTES = 10 * 1024 * 1024     # if double-buffered inputs fit, use full-K


def matmul_bias_act(x, w, b, relu=False, out_dtype=jnp.float32):
    """x: (M, K), w: (K, N), b: (N,) -> act(x @ w + b).  bf16 operands, f32 acc."""
    M, K = x.shape
    _, N = w.shape
    xb = x.astype(jnp.bfloat16)
    wb = w.astype(jnp.bfloat16)
    bb = b.astype(jnp.float32).reshape(1, N)

    # ---- N tiling: avoid padding when N is already lane friendly -----------
    if N % 128 == 0:
        tn, Np = min(1024, N), N
    elif N <= 256:
        tn, Np = N, N                       # full-dim lane block (e.g. 64)
    else:
        tn, Np = 128, _round_up(N, 128)
        wb = jnp.pad(wb, ((0, 0), (0, Np - N)))
        bb = jnp.pad(bb, ((0, 0), (0, Np - N)))

    # ---- M tiling: pick a divisor of M when possible (no patch-matrix pad) -
    max_tm = max(8, min(2048, _LHS_BLOCK_BYTES // (K * 2) // 8 * 8))
    if M <= max_tm:
        tm = _round_up(M, 8)
    else:
        tm = _largest_divisor_tile(M, max_tm, 8) or min(256, max_tm)
    Mp = _round_up(M, tm)
    if Mp != M:
        xb = jnp.pad(xb, ((0, Mp - M), (0, 0)))

    # ---- K: single full-K block when the double-buffered blocks fit VMEM ---
    full_k_vmem = 2 * 2 * (tm * K + K * tn)  # bf16, double-buffered in-blocks
    if full_k_vmem <= _FULL_K_VMEM_BYTES:
        tk, Kp, multi_k = K, K, False
    else:
        max_tk = max(128, _RHS_BLOCK_BYTES // (tn * 2) // 128 * 128)
        tk = _largest_divisor_tile(K, max_tk, 128) or 512
        Kp, multi_k = _round_up(K, tk), True
        if Kp != K:
            xb = jnp.pad(xb, ((0, 0), (0, Kp - K)))
            wb = jnp.pad(wb, ((0, Kp - K), (0, 0)))

    if multi_k:
        out = pl.pallas_call(
            functools.partial(_mm_kernel_multi_k, relu=relu),
            out_shape=jax.ShapeDtypeStruct((Mp, Np), out_dtype),
            grid_spec=pltpu.PrefetchScalarGridSpec(
                num_scalar_prefetch=0,
                grid=(Mp // tm, Np // tn, Kp // tk),
                in_specs=[
                    pl.BlockSpec((tm, tk), lambda i, j, k: (i, k)),
                    pl.BlockSpec((tk, tn), lambda i, j, k: (k, j)),
                    pl.BlockSpec((1, tn), lambda i, j, k: (0, j)),
                ],
                out_specs=pl.BlockSpec((tm, tn), lambda i, j, k: (i, j)),
                scratch_shapes=[pltpu.VMEM((tm, tn), jnp.float32)],
            ),
            compiler_params=pltpu.CompilerParams(
                dimension_semantics=("parallel", "parallel", "arbitrary")
            ),
        )(xb, wb, bb)
    else:
        out = pl.pallas_call(
            functools.partial(_mm_kernel_single_k, relu=relu),
            out_shape=jax.ShapeDtypeStruct((Mp, Np), out_dtype),
            grid_spec=pltpu.PrefetchScalarGridSpec(
                num_scalar_prefetch=0,
                grid=(Mp // tm, Np // tn),
                in_specs=[
                    pl.BlockSpec((tm, K), lambda i, j: (i, 0)),
                    pl.BlockSpec((K, tn), lambda i, j: (0, j)),
                    pl.BlockSpec((1, tn), lambda i, j: (0, j)),
                ],
                out_specs=pl.BlockSpec((tm, tn), lambda i, j: (i, j)),
            ),
            compiler_params=pltpu.CompilerParams(
                dimension_semantics=("parallel", "parallel")
            ),
        )(xb, wb, bb)
    return out[:M, :N]


# ---------------------------------------------------------------------------
# 2x2 max-pool kernel (stride 2, floor mode == F.max_pool2d(x, 2))
# ---------------------------------------------------------------------------
def _pool_kernel(x_ref, o_ref):
    # x_ref: (tr, 2, OW, 2, C) -- max over the two window axes.
    x = x_ref[...]
    y = jnp.maximum(x[:, 0], x[:, 1])   # vertical max   -> (tr, OW, 2, C)
    o_ref[...] = jnp.max(y, axis=2)     # horizontal max -> (tr, OW, C)


def max_pool2x2(x):
    """x: (N, H, W, C) -> (N, H//2, W//2, C)."""
    N, H, W, C = x.shape
    OH, OW = H // 2, W // 2
    x = x[:, : 2 * OH, : 2 * OW, :]
    rows = N * OH
    # Pure row-major reshape (free) -- no HBM transpose round trip.
    xr = x.reshape(rows, 2, OW, 2, C)
    # VMEM estimate per row-tile: the (2, C) minor tile pads sublanes 2 -> 8.
    bytes_per_row = 2 * OW * 8 * C * x.dtype.itemsize
    tr = rows
    while tr % 2 == 0 and tr * bytes_per_row > (1 << 21):
        tr //= 2

    out = pl.pallas_call(
        _pool_kernel,
        out_shape=jax.ShapeDtypeStruct((rows, OW, C), x.dtype),
        grid=(rows // tr,),
        in_specs=[pl.BlockSpec((tr, 2, OW, 2, C), lambda i: (i, 0, 0, 0, 0))],
        out_specs=pl.BlockSpec((tr, OW, C), lambda i: (i, 0, 0)),
        compiler_params=pltpu.CompilerParams(dimension_semantics=("parallel",)),
    )(xr)
    return out.reshape(N, OH, OW, C)


# ---------------------------------------------------------------------------
# Conv (valid, stride 1) = im2col (XLA glue, bf16) + fused Pallas matmul
# ---------------------------------------------------------------------------
def _im2col(x, kh, kw):
    N, H, W, C = x.shape
    OH, OW = H - kh + 1, W - kw + 1
    cols = []
    for i in range(kh):
        for j in range(kw):
            cols.append(x[:, i : i + OH, j : j + OW, :])
    patches = jnp.stack(cols, axis=-2)  # (N, OH, OW, kh*kw, C)
    return patches.reshape(N * OH * OW, kh * kw * C), OH, OW


def conv2d_relu(x, w, b):
    """x: NHWC (bf16), w: (kh, kw, Cin, Cout), b: (Cout,) -> NHWC bf16."""
    N = x.shape[0]
    kh, kw, cin, cout = w.shape
    patches, OH, OW = _im2col(x, kh, kw)
    out = matmul_bias_act(
        patches, w.reshape(kh * kw * cin, cout), b, relu=True,
        out_dtype=jnp.bfloat16,
    )
    return out.reshape(N, OH, OW, cout)


# ---------------------------------------------------------------------------
# Adaptive average pool (PyTorch AdaptiveAvgPool2d semantics), JAX glue.
# With the chosen input size conv4's output is exactly 6x6 -> identity.
# ---------------------------------------------------------------------------
def adaptive_avg_pool(x, out_h, out_w):
    N, H, W, C = x.shape
    if (H, W) == (out_h, out_w):
        return x
    rows = []
    for i in range(out_h):
        hs, he = (i * H) // out_h, -(-((i + 1) * H) // out_h)
        cols = []
        for j in range(out_w):
            ws, we = (j * W) // out_w, -(-((j + 1) * W) // out_w)
            cols.append(
                jnp.mean(x[:, hs:he, ws:we, :].astype(jnp.float32), axis=(1, 2))
            )
        rows.append(jnp.stack(cols, axis=1))
    return jnp.stack(rows, axis=1).astype(x.dtype)  # (N, out_h, out_w, C)


# ---------------------------------------------------------------------------
# Model: parameters + forward
# ---------------------------------------------------------------------------
def init_params(key):
    def conv_w(k, kh, kw, cin, cout):
        scale = 1.0 / jnp.sqrt(kh * kw * cin)
        w = jax.random.normal(k, (kh, kw, cin, cout), jnp.float32) * scale
        return w.astype(jnp.bfloat16)   # stored bf16: halves weight HBM stream

    def fc_w(k, fin, fout, dtype):
        scale = 1.0 / jnp.sqrt(fin)
        return (jax.random.normal(k, (fin, fout), jnp.float32) * scale).astype(dtype)

    ks = jax.random.split(key, 6)
    return {
        "w1": conv_w(ks[0], 10, 10, 2, 64), "b1": jnp.zeros((64,), jnp.float32),
        "w2": conv_w(ks[1], 7, 7, 64, 128), "b2": jnp.zeros((128,), jnp.float32),
        "w3": conv_w(ks[2], 4, 4, 128, 128), "b3": jnp.zeros((128,), jnp.float32),
        "w4": conv_w(ks[3], 4, 4, 128, 256), "b4": jnp.zeros((256,), jnp.float32),
        # fc weights stored as (in, out) == transpose of PyTorch (out, in)
        "wf1": fc_w(ks[4], 256 * 6 * 6, 4096, jnp.bfloat16),
        "bf1": jnp.zeros((4096,), jnp.float32),
        "wf2": fc_w(ks[5], 4096, 3, jnp.float32),
        "bf2": jnp.zeros((3,), jnp.float32),
    }


def forward(params, x_nchw):
    # layout: input NCHW (PyTorch convention) -> internal NHWC bf16
    x = jnp.transpose(x_nchw.astype(jnp.float32), (0, 2, 3, 1)).astype(jnp.bfloat16)
    x = conv2d_relu(x, params["w1"], params["b1"])
    x = max_pool2x2(x)
    x = conv2d_relu(x, params["w2"], params["b2"])
    x = max_pool2x2(x)
    x = conv2d_relu(x, params["w3"], params["b3"])
    x = max_pool2x2(x)
    x = conv2d_relu(x, params["w4"], params["b4"])
    x = adaptive_avg_pool(x, 6, 6)
    # flatten in PyTorch NCHW order: (N, C, H, W) -> (N, C*H*W)
    x = jnp.transpose(x, (0, 3, 1, 2)).reshape(x.shape[0], -1)
    x = matmul_bias_act(x, params["wf1"], params["bf1"], relu=True,
                        out_dtype=jnp.float32)
    # fc2: 4096 -> 3.  Deliberately plain jnp: N=3 would waste >97% of MXU lanes.
    x = jnp.dot(x, params["wf2"], preferred_element_type=jnp.float32) + params["bf2"]
    return x


if __name__ == "__main__":
    key = jax.random.PRNGKey(0)
    k_x, k_p = jax.random.split(key)

    # Input chosen so the spatial chain is 105 ->96 ->48 ->42 ->21 ->18 ->9 ->6
    # (conv4 output is exactly 6x6, so AdaptiveAvgPool2d((6,6)) is identity).
    x = jax.random.normal(k_x, (2, 2, 105, 105), jnp.float32)
    params = init_params(k_p)

    # small sanity check of the fused matmul kernel against jnp (bf16, f32 acc)
    a = jax.random.normal(jax.random.PRNGKey(1), (16, 40), jnp.float32)
    w = jax.random.normal(jax.random.PRNGKey(2), (40, 20), jnp.float32)
    b = jax.random.normal(jax.random.PRNGKey(3), (20,), jnp.float32)
    got = matmul_bias_act(a, w, b, relu=True)
    ref = jnp.maximum(
        jnp.dot(a.astype(jnp.bfloat16), w.astype(jnp.bfloat16),
                preferred_element_type=jnp.float32) + b,
        0.0,
    )
    assert jnp.allclose(got, ref, atol=1e-1, rtol=1e-1)

    out = jax.jit(forward)(params, x)
    out = jax.block_until_ready(out)
    assert out.shape == (2, 3)
    assert bool(jnp.all(jnp.isfinite(out)))
    print("KERNEL_OK")
</pallas_src>

<mosaic_0001>
module attributes {stable_mosaic.version = 11 : i64} {
  func.func @_mm_kernel_single_k(%arg0: i32, %arg1: i32, %arg2: memref<16x40xbf16, #tpu.memory_space<vmem>>, %arg3: memref<40x20xbf16, #tpu.memory_space<vmem>>, %arg4: memref<1x20xf32, #tpu.memory_space<vmem>>, %arg5: memref<16x20xf32, #tpu.memory_space<vmem>>) attributes {dimension_semantics = [#tpu.dimension_semantics<parallel>, #tpu.dimension_semantics<parallel>], iteration_bounds = array<i64: 1, 1>, scalar_prefetch = 0 : i64, scratch_operands = 0 : i64, tpu.core_type = #tpu.core_type<tc>, window_params = [{transform_indices = @transform_0, window_bounds = array<i64: 16, 40>}, {transform_indices = @transform_1, window_bounds = array<i64: 40, 20>}, {transform_indices = @transform_2, window_bounds = array<i64: 1, 20>}, {transform_indices = @transform_3, window_bounds = array<i64: 16, 20>}]} {
    %c0 = arith.constant 0 : index
    %c0_0 = arith.constant 0 : index
    %0 = vector.load %arg2[%c0, %c0_0] : memref<16x40xbf16, #tpu.memory_space<vmem>>, vector<16x40xbf16>
    %c0_1 = arith.constant 0 : index
    %c0_2 = arith.constant 0 : index
    %1 = vector.load %arg3[%c0_1, %c0_2] : memref<40x20xbf16, #tpu.memory_space<vmem>>, vector<40x20xbf16>
    %cst = arith.constant dense<0.000000e+00> : vector<16x20xf32>
    %2 = tpu.matmul %0, %1, %cst {dimension_numbers = #tpu.dot_dimension_numbers<[1], [0], [0], [1], [0, 0, 1, 1], [], []>} : vector<16x40xbf16>, vector<40x20xbf16>, vector<16x20xf32> -> vector<16x20xf32>
    %c0_3 = arith.constant 0 : index
    %c0_4 = arith.constant 0 : index
    %3 = vector.load %arg4[%c0_3, %c0_4] : memref<1x20xf32, #tpu.memory_space<vmem>>, vector<1x20xf32>
    %4 = vector.broadcast %3 : vector<1x20xf32> to vector<16x20xf32>
    %5 = arith.addf %2, %4 : vector<16x20xf32>
    %cst_5 = arith.constant 0.000000e+00 : f32
    %6 = vector.broadcast %cst_5 : f32 to vector<16x20xf32>
    %7 = arith.maximumf %5, %6 : vector<16x20xf32>
    %c0_6 = arith.constant 0 : index
    %c0_7 = arith.constant 0 : index
    %8 = vector.load %arg5[%c0_6, %c0_7] : memref<16x20xf32, #tpu.memory_space<vmem>>, vector<16x20xf32>
    tpu.vector_store %arg5[%c0_6, %c0_7], %7 {strides = array<i32>} : memref<16x20xf32, #tpu.memory_space<vmem>>, vector<16x20xf32>,
    return
  }
  func.func @transform_0(%arg0: i32, %arg1: i32) -> (i32, i32) {
    %c0_i32 = arith.constant 0 : i32
    %c0_i32_0 = arith.constant 0 : i32
    return %arg0, %c0_i32 : i32, i32
  }
  func.func @transform_1(%arg0: i32, %arg1: i32) -> (i32, i32) {
    %c0_i32 = arith.constant 0 : i32
    %c0_i32_0 = arith.constant 0 : i32
    return %c0_i32, %arg1 : i32, i32
  }
  func.func @transform_2(%arg0: i32, %arg1: i32) -> (i32, i32) {
    %c0_i32 = arith.constant 0 : i32
    %c0_i32_0 = arith.constant 0 : i32
    return %c0_i32, %arg1 : i32, i32
  }
  func.func @transform_3(%arg0: i32, %arg1: i32) -> (i32, i32) {
    %c0_i32 = arith.constant 0 : i32
    return %arg0, %arg1 : i32, i32
  }
}

</mosaic_0001>

<llo_original>
// kernel: tpu_custom_call.1
$region0: #{tpu_custom_call.1}
  #allocation0 [shape = 'u32[]', space=smem, size = 0x4, offset = 0x4, fixed_abs, tag = 'smem constant byte address 0x4 - core index']
  #allocation1 [shape = 'u32[144,128]{1,0:T(1,128)}', space=vmem, size = 0x12000, scoped, tag = 'internal scratch']
  %s0 = inlined_call_operand.vmem [shape: bf16[16,40], index: 0, kind: input, shape index: {}]
  %s1 = inlined_call_operand.vmem [shape: bf16[40,20], index: 1, kind: input, shape index: {}]
  %s2 = inlined_call_operand.vmem [shape: f32[1,20], index: 2, kind: input, shape index: {}]
  %s3 = inlined_call_operand.hbm [shape: f32[16,20], index: 3, kind: output, shape index: {}]
  %s4 = sld [smem:[#allocation0]]
  $region22: #{tpu_custom_call.1} parent=0
    _
  %s6 = ssub.s32 1, %s4
  %s7 = scalar_select 0, %s6, %s4
  $region1: #{tpu_custom_call.1} parent=0
    #allocation2 [shape = 'u8[8192]{0}', space=vmem, size = 0x2000, scoped, tag = 'output window, operand 0, single buffered']
    #allocation3 [shape = 's32[1]{0}', space=sflag, size = 0x4, scoped, tag = 'scoped memory for tpu_custom_call.1']
    %8 = vsyncpa [#allocation3], 0
    // Predicated region
    $region2: #{tpu_custom_call.1} parent=1 // pred_check
      _
    $region3: #{tpu_custom_call.1} parent=1 // pred_check_branch
      %10 = sbr.rel (0) target = $region5
    $region4: #{tpu_custom_call.1} parent=1 // pred_region
      _
    $region5: #{tpu_custom_call.1} parent=1 // pred_fallthru
      _
    // Predicated region
    $region6: #{tpu_custom_call.1} parent=1 // pred_check
      _
    $region7: #{tpu_custom_call.1} parent=1 // pred_check_branch
      %12 = sbr.rel (0) target = $region9
    $region8: #{tpu_custom_call.1} parent=1 // pred_region
      _
    $region9: #{tpu_custom_call.1} parent=1 // pred_fallthru
      _
    // Predicated region
    $region10: #{tpu_custom_call.1} parent=1 // pred_check
      _
    $region11: #{tpu_custom_call.1} parent=1 // pred_check_branch
      %14 = sbr.rel (0) target = $region13
    $region12: #{tpu_custom_call.1} parent=1 // pred_region
      _
    $region13: #{tpu_custom_call.1} parent=1 // pred_fallthru
      _
    %v16 = vld [vmem:[%s0] sm:$0xf]
    %v17 = vld [vmem:[%s0 + $0x4] sm:$0xf]
    %v18 = vld [vmem:[%s1] sm:$0xf]
    %v19 = vld [vmem:[%s1 + $0x4] sm:$0xf]
    %v20 = vld [vmem:[%s1 + $0x8] sm:$0xf]
    %v21 = vld [vmem:[%s1 + $0xc] sm:$0xf]
    %v22 = vld [vmem:[%s1 + $0x10] sm:$0xf]
    %v23 = vld [vmem:[%s2] sm:$0x1]
    %v25 = vlaneseq
    %v26 = vshrl.u32 %v25, 7
    %v27 = vsub.s32 0, %v26
    %v28 = vrot.slane %v23, %v27
    %v32 = vunpack.c.l.b16 %v16
    %v33 = vunpack.c.l.b16 %v17
    %v34 = vpack.c.b16 %v33, %v32
    %v40 = vunpack.c.l.b16 %v18
    %v41 = vunpack.c.l.b16 %v19
    %v42 = vunpack.c.l.b16 %v20
    %v43 = vunpack.c.l.b16 %v21
    %v44 = vunpack.c.l.b16 %v22
    %v45 = vpack.c.b16 %v41, %v40
    %v46 = vpack.c.b16 %v43, %v42
    %v47 = vpack.c.b16 %v44, %v44
    %vm50 = vcmask 326656
    %v52 = vsel %vm50, %v34, 0
    %vm54 = vcmask 1043456
    %v56 = vsel %vm54, %v47, 0
    %58 = vmatprep.subr.bf16.mxu0 0
    %59 = vmatpush1.bf16.msra.mxu0 0
    %60 = vmatprep.subr.bf16.mxu0 0
    %61 = vmatpush1.bf16.msra.mxu0 0
    %62 = vmatprep.subr.bf16.mxu0 0
    %63 = vmatpush1.bf16.msra.mxu0 0
    %64 = vmatprep.subr.bf16.mxu0 0
    %65 = vmatpush1.bf16.msra.mxu0 0
    %66 = vmatprep.subr.bf16.mxu0 0
    %67 = vmatpush1.bf16.msra.mxu0 0
    %68 = vmatprep.subr.bf16.mxu0 0
    %69 = vmatpush1.bf16.msra.mxu0 %v56
    %70 = vmatprep.subr.bf16.mxu0 0
    %71 = vmatpush1.bf16.msra.mxu0 %v46
    %72 = vmatprep.subr.bf16.mxu0 0
    %73 = vmatpush1.bf16.msra.mxu0 %v45
    %74 = vmatprep.subr.bf16.mxu0 0
    %75 = vmatpush2.bf16.msra.mxu0 0
    %76 = vmatprep.subr.bf16.mxu0 0
    %77 = vmatpush2.bf16.msra.mxu0 0
    %78 = vmatprep.subr.bf16.mxu0 0
    %79 = vmatpush2.bf16.msra.mxu0 0
    %80 = vmatprep.subr.bf16.mxu0 0
    %81 = vmatpush2.bf16.msra.mxu0 0
    %82 = vmatprep.subr.bf16.mxu0 0
    %83 = vmatpush2.bf16.msra.mxu0 0
    %84 = vmatprep.subr.bf16.mxu0 0
    %85 = vmatpush2.bf16.msra.mxu0 0
    %86 = vmatprep.subr.bf16.mxu0 0
    %87 = vmatpush2.bf16.msra.mxu0 0
    %88 = vmatprep.subr.bf16.mxu0 0
    %89 = vmatpush2.bf16.msra.mxu0 0
    %90 = vmatprep.mubr.bf16.mxu0 0
    %91 = vmatmul.mubr.bf16.gmra.mxu0 %v52
    %v92 = vpop.f32.mrf.mxu0
    %v93 = vadd.f32 %v28, %v92
    %v94 = vpop.f32.mrf.mxu0
    %v95 = vpop.f32.mrf.mxu0
    %v96 = vadd.f32 %v28, %v95
    %v97 = vpop.f32.mrf.mxu0
    %98 = vdwg.mxu0
    %v99 = vmax.f32 %v93, 0.0
    %v100 = vmax.f32 %v96, 0.0
    %vm101 = vcmask 162816
    %102 = vst.msk [vmem:[#allocation2] sm:$0xff] %vm101, %v99
    %103 = vst.msk [vmem:[#allocation2 + $0x8] sm:$0xff] %vm101, %v100
    // Predicated region
    $region14: #{tpu_custom_call.1} parent=1 // pred_check
      _
    $region15: #{tpu_custom_call.1} parent=1 // pred_check_branch
      %105 = sbr.rel (0) target = $region17
    $region16: #{tpu_custom_call.1} parent=1 // pred_region
      %s107 = ssub.s32 256, 256
      %108 = vsyncadd [#allocation3], %s107
      %s109 = sshll.u32 [#allocation2], 4
      %s110 = int_to_ptr.vmem [resolvable:$true] %s109
      %115 = dma.vmem_to_hbm [thread:$0]  %s110, 256, %s3, [#allocation3], 128, 128, 8
    $region17: #{tpu_custom_call.1} parent=1 // pred_fallthru
      _
    // Predicated region
    $region18: #{tpu_custom_call.1} parent=1 // pred_check
      _
    $region19: #{tpu_custom_call.1} parent=1 // pred_check_branch
      %117 = sbr.rel (0) target = $region21
    $region20: #{tpu_custom_call.1} parent=1 // pred_region
      %118 = dma.done [#allocation3], 256
    $region21: #{tpu_custom_call.1} parent=1 // pred_fallthru
      _
    %119 = vsyncpa [#allocation3], 1

</llo_original>
